<compile_context>
chip_gen: v5e
topology: v5e:2x2
jax: 0.10.0
libtpu: 0.0.40
codegen_flags: <defaults>
</compile_context>

<pallas_src>
import functools

import jax
import jax.numpy as jnp
import numpy as np
from jax.experimental import pallas as pl
from jax.experimental.pallas import tpu as pltpu


def _attention_stats_kernel(x1_ref, x2_ref, w_ref, att_ref, stats_ref):
    """Bilinear attention for one (batch, pixel-tile) block + partial BN stats.

    x1_ref:   (1, E, T) encoder features (channels on sublanes, pixels on lanes)
    x2_ref:   (1, D, T) decoder features
    w_ref:    (O, E*D)  reshaped attention weight, W2[o, e*D+d] = W[e, o, d]
    att_ref:  (1, O, T) attention output tile (lane-dense)
    stats_ref:(1, 1, O, 2) per-tile [sum ; sum of squares] per output channel
    """
    x1 = x1_ref[0, :, :]                                   # (E, T)
    x2 = x2_ref[0, :, :]                                   # (D, T)
    E, T = x1.shape
    D = x2.shape[0]

    # Per-pixel outer product over channels: g[(e,d), p] = x1[e,p] * x2[d,p].
    g = (x1[:, None, :] * x2[None, :, :]).reshape(E * D, T)   # (E*D, T)

    # Single MXU contraction over the fused (e,d) axis: (O, E*D) @ (E*D, T).
    att = jnp.dot(w_ref[:, :], g, preferred_element_type=jnp.float32)  # (O, T)
    att_ref[0, :, :] = att

    # Per-tile partial BN statistics (zero-padded pixels contribute nothing).
    s = jnp.sum(att, axis=1, keepdims=True)                # (O, 1)
    ss = jnp.sum(att * att, axis=1, keepdims=True)         # (O, 1)
    stats_ref[0, 0, :, :] = jnp.concatenate([s, ss], axis=1)   # (O, 2)


def _bn_tanh_kernel(att_ref, scale_ref, shift_ref, out_ref):
    """Fused affine batch-norm (pre-folded scale/shift) + tanh, lane-dense."""
    out_ref[0, :, :] = jnp.tanh(
        att_ref[0, :, :] * scale_ref[:, :] + shift_ref[:, :])


def _round_up(x, m):
    return (x + m - 1) // m * m


@functools.partial(jax.jit, static_argnames=("eps", "tile"))
def encoder_decoder_attention(encoder_inp, decoder_inp, attention_weight,
                              gamma, beta, *, eps=1e-5, tile=512):
    """JAX wrapper reproducing EncoderDecoderAttention.forward (NCHW in/out)."""
    B, E, H, W = encoder_inp.shape
    _, D, _, _ = decoder_inp.shape
    _, O, _ = attention_weight.shape
    HW = H * W
    P = B * HW                       # true pixel count for the BN statistics

    # NCHW viewed channels-on-sublanes / pixels-on-lanes: (B, C, H*W).
    x1 = encoder_inp.reshape(B, E, HW)
    x2 = decoder_inp.reshape(B, D, HW)

    # Lane-dense pixel tile (multiple of 128); zero-pad the pixel axis so the
    # grid divides evenly.  Padded pixels are all-zero -> zero attention ->
    # zero contribution to the BN sums, so dividing by the true P stays exact.
    tile_pix = min(tile, _round_up(HW, 128))
    HW_pad = _round_up(HW, tile_pix)
    if HW_pad != HW:
        pad = ((0, 0), (0, 0), (0, HW_pad - HW))
        x1 = jnp.pad(x1, pad)
        x2 = jnp.pad(x2, pad)
    n_tiles = HW_pad // tile_pix

    # W2[o, e*D + d] = attention_weight[e, o, d]
    w2 = jnp.transpose(attention_weight, (1, 0, 2)).reshape(O, E * D)
    # TODO(synk): for very large E*D (realistic segmentation channel counts)
    # tile w2 over O with an extra grid axis and set vmem_limit_bytes so the
    # weight block fits v7x's 64 MiB VMEM; also cast x1/x2/w2 to bf16 on
    # v6e/v7x (keep f32 accumulation) to halve HBM traffic.

    att, stats = pl.pallas_call(
        _attention_stats_kernel,
        out_shape=(jax.ShapeDtypeStruct((B, O, HW_pad), jnp.float32),
                   jax.ShapeDtypeStruct((B, n_tiles, O, 2), jnp.float32)),
        grid=(B, n_tiles),
        in_specs=[pl.BlockSpec((1, E, tile_pix), lambda b, i: (b, 0, i)),
                  pl.BlockSpec((1, D, tile_pix), lambda b, i: (b, 0, i)),
                  pl.BlockSpec((O, E * D), lambda b, i: (0, 0))],
        out_specs=(pl.BlockSpec((1, O, tile_pix), lambda b, i: (b, 0, i)),
                   pl.BlockSpec((1, 1, O, 2), lambda b, i: (b, i, 0, 0))),
        compiler_params=pltpu.CompilerParams(
            dimension_semantics=("parallel", "parallel")),
    )(x1, x2, w2)

    # Fold training-mode BatchNorm (batch stats, biased variance) into a
    # per-channel scale/shift.  Clamp var at 0 against f32 cancellation.
    sums = jnp.sum(stats[..., 0], axis=(0, 1))             # (O,)
    sumsq = jnp.sum(stats[..., 1], axis=(0, 1))            # (O,)
    mean = sums / P
    var = jnp.maximum(sumsq / P - mean * mean, 0.0)
    inv_std = gamma / jnp.sqrt(var + eps)
    scale = inv_std.reshape(O, 1)
    shift = (beta - mean * inv_std).reshape(O, 1)

    out = pl.pallas_call(
        _bn_tanh_kernel,
        out_shape=jax.ShapeDtypeStruct((B, O, HW_pad), jnp.float32),
        grid=(B, n_tiles),
        in_specs=[pl.BlockSpec((1, O, tile_pix), lambda b, i: (b, 0, i)),
                  pl.BlockSpec((O, 1), lambda b, i: (0, 0)),
                  pl.BlockSpec((O, 1), lambda b, i: (0, 0))],
        out_specs=pl.BlockSpec((1, O, tile_pix), lambda b, i: (b, 0, i)),
        input_output_aliases={0: 0},    # write BN+tanh in place over att
        compiler_params=pltpu.CompilerParams(
            dimension_semantics=("parallel", "parallel")),
    )(att, scale, shift)

    # (B, O, HW_pad) -> drop pixel padding -> NCHW, no transpose needed.
    return out[:, :, :HW].reshape(B, O, H, W)


if __name__ == "__main__":
    B, E, D, O, H, W = 2, 4, 8, 6, 16, 16

    key = jax.random.PRNGKey(0)
    k1, k2, k3 = jax.random.split(key, 3)
    encoder_inp = jax.random.normal(k1, (B, E, H, W), jnp.float32)
    decoder_inp = jax.random.normal(k2, (B, D, H, W), jnp.float32)

    # xavier_uniform_ on an (E, O, D) tensor: fan_in = O*D, fan_out = E*D.
    bound = float(np.sqrt(6.0 / (O * D + E * D)))
    attention_weight = jax.random.uniform(
        k3, (E, O, D), jnp.float32, minval=-bound, maxval=bound)

    gamma = jnp.ones((O,), jnp.float32)   # BatchNorm2d default weight
    beta = jnp.zeros((O,), jnp.float32)   # BatchNorm2d default bias

    out = encoder_decoder_attention(encoder_inp, decoder_inp,
                                    attention_weight, gamma, beta)
    out = jax.block_until_ready(out)

    # Pure-JAX reference of the PyTorch forward (training-mode BN).
    x1 = jnp.transpose(encoder_inp, (0, 2, 3, 1))
    x2 = jnp.transpose(decoder_inp, (0, 2, 3, 1))
    att_ref = jnp.einsum('bhwe,eod,bhwd->bhwo', x1, attention_weight, x2)
    mean = att_ref.mean(axis=(0, 1, 2))
    var = att_ref.var(axis=(0, 1, 2))
    ref = jnp.tanh((att_ref - mean) / jnp.sqrt(var + 1e-5) * gamma + beta)
    ref = jnp.transpose(ref, (0, 3, 1, 2))

    assert out.shape == (B, O, H, W)
    np.testing.assert_allclose(np.asarray(out), np.asarray(ref),
                               atol=2e-5, rtol=2e-5)
    print("KERNEL_OK")
</pallas_src>

<mosaic_0001>
module attributes {stable_mosaic.version = 11 : i64} {
  func.func @_attention_stats_kernel(%arg0: i32, %arg1: i32, %arg2: memref<1x4x256xf32, #tpu.memory_space<vmem>>, %arg3: memref<1x8x256xf32, #tpu.memory_space<vmem>>, %arg4: memref<6x32xf32, #tpu.memory_space<vmem>>, %arg5: memref<1x6x256xf32, #tpu.memory_space<vmem>>, %arg6: memref<1x1x6x2xf32, #tpu.memory_space<vmem>>) attributes {dimension_semantics = [#tpu.dimension_semantics<parallel>, #tpu.dimension_semantics<parallel>], iteration_bounds = array<i64: 2, 1>, scalar_prefetch = 0 : i64, scratch_operands = 0 : i64, tpu.core_type = #tpu.core_type<tc>, window_params = [{transform_indices = @transform_0, window_bounds = array<i64: 1, 4, 256>}, {transform_indices = @transform_1, window_bounds = array<i64: 1, 8, 256>}, {pipeline_mode = #tpu.pipeline_mode<synchronous>, transform_indices = @transform_2, window_bounds = array<i64: 6, 32>}, {transform_indices = @transform_3, window_bounds = array<i64: 1, 6, 256>}, {transform_indices = @transform_4, window_bounds = array<i64: 1, 1, 6, 2>}]} {
    %c0 = arith.constant 0 : index
    %c0_0 = arith.constant 0 : index
    %c0_1 = arith.constant 0 : index
    %0 = vector.load %arg2[%c0, %c0_0, %c0_1] : memref<1x4x256xf32, #tpu.memory_space<vmem>>, vector<1x4x256xf32>
    %1 = vector.shape_cast %0 : vector<1x4x256xf32> to vector<4x256xf32>
    %c0_2 = arith.constant 0 : index
    %c0_3 = arith.constant 0 : index
    %c0_4 = arith.constant 0 : index
    %2 = vector.load %arg3[%c0_2, %c0_3, %c0_4] : memref<1x8x256xf32, #tpu.memory_space<vmem>>, vector<1x8x256xf32>
    %3 = vector.shape_cast %2 : vector<1x8x256xf32> to vector<8x256xf32>
    %4 = vector.shape_cast %1 : vector<4x256xf32> to vector<4x1x256xf32>
    %5 = vector.shape_cast %3 : vector<8x256xf32> to vector<1x8x256xf32>
    %6 = vector.broadcast %4 : vector<4x1x256xf32> to vector<4x8x256xf32>
    %7 = vector.broadcast %5 : vector<1x8x256xf32> to vector<4x8x256xf32>
    %8 = arith.mulf %6, %7 : vector<4x8x256xf32>
    %9 = vector.shape_cast %8 : vector<4x8x256xf32> to vector<32x256xf32>
    %c0_5 = arith.constant 0 : index
    %c0_6 = arith.constant 0 : index
    %10 = vector.load %arg4[%c0_5, %c0_6] : memref<6x32xf32, #tpu.memory_space<vmem>>, vector<6x32xf32>
    %cst = arith.constant dense<0.000000e+00> : vector<6x256xf32>
    %11 = tpu.matmul %10, %9, %cst {dimension_numbers = #tpu.dot_dimension_numbers<[1], [0], [0], [1], [0, 0, 1, 1], [], []>} : vector<6x32xf32>, vector<32x256xf32>, vector<6x256xf32> -> vector<6x256xf32>
    %c0_7 = arith.constant 0 : index
    %c0_8 = arith.constant 0 : index
    %c0_9 = arith.constant 0 : index
    %12 = vector.load %arg5[%c0_7, %c0_8, %c0_9] : memref<1x6x256xf32, #tpu.memory_space<vmem>>, vector<1x6x256xf32>
    %13 = vector.shape_cast %12 : vector<1x6x256xf32> to vector<6x256xf32>
    %14 = vector.shape_cast %11 : vector<6x256xf32> to vector<1x6x256xf32>
    tpu.vector_store %arg5[%c0_7, %c0_8, %c0_9], %14 {strides = array<i32>} : memref<1x6x256xf32, #tpu.memory_space<vmem>>, vector<1x6x256xf32>,
    %cst_10 = arith.constant dense<0.000000e+00> : vector<6xf32>
    %15 = vector.multi_reduction <add>, %11, %cst_10 [1] : vector<6x256xf32> to vector<6xf32>
    %16 = vector.shape_cast %15 : vector<6xf32> to vector<6x1xf32>
    %17 = arith.mulf %11, %11 : vector<6x256xf32>
    %cst_11 = arith.constant dense<0.000000e+00> : vector<6xf32>
    %18 = vector.multi_reduction <add>, %17, %cst_11 [1] : vector<6x256xf32> to vector<6xf32>
    %19 = vector.shape_cast %18 : vector<6xf32> to vector<6x1xf32>
    %20 = tpu.concatenate %16, %19 in 1 : vector<6x1xf32>, vector<6x1xf32> -> vector<6x2xf32>
    %c0_12 = arith.constant 0 : index
    %c0_13 = arith.constant 0 : index
    %c0_14 = arith.constant 0 : index
    %c0_15 = arith.constant 0 : index
    %21 = vector.load %arg6[%c0_12, %c0_13, %c0_14, %c0_15] : memref<1x1x6x2xf32, #tpu.memory_space<vmem>>, vector<1x1x6x2xf32>
    %22 = vector.shape_cast %21 : vector<1x1x6x2xf32> to vector<6x2xf32>
    %23 = vector.shape_cast %20 : vector<6x2xf32> to vector<1x1x6x2xf32>
    tpu.vector_store %arg6[%c0_12, %c0_13, %c0_14, %c0_15], %23 {strides = array<i32>} : memref<1x1x6x2xf32, #tpu.memory_space<vmem>>, vector<1x1x6x2xf32>,
    return
  }
  func.func @transform_0(%arg0: i32, %arg1: i32) -> (i32, i32, i32) {
    %c0_i32 = arith.constant 0 : i32
    %c0_i32_0 = arith.constant 0 : i32
    return %arg0, %c0_i32, %arg1 : i32, i32, i32
  }
  func.func @transform_1(%arg0: i32, %arg1: i32) -> (i32, i32, i32) {
    %c0_i32 = arith.constant 0 : i32
    %c0_i32_0 = arith.constant 0 : i32
    return %arg0, %c0_i32, %arg1 : i32, i32, i32
  }
  func.func @transform_2(%arg0: i32, %arg1: i32) -> (i32, i32) {
    %c0_i32 = arith.constant 0 : i32
    %c0_i32_0 = arith.constant 0 : i32
    %c0_i32_1 = arith.constant 0 : i32
    return %c0_i32, %c0_i32_0 : i32, i32
  }
  func.func @transform_3(%arg0: i32, %arg1: i32) -> (i32, i32, i32) {
    %c0_i32 = arith.constant 0 : i32
    %c0_i32_0 = arith.constant 0 : i32
    return %arg0, %c0_i32, %arg1 : i32, i32, i32
  }
  func.func @transform_4(%arg0: i32, %arg1: i32) -> (i32, i32, i32, i32) {
    %c0_i32 = arith.constant 0 : i32
    %c0_i32_0 = arith.constant 0 : i32
    %c0_i32_1 = arith.constant 0 : i32
    return %arg0, %arg1, %c0_i32, %c0_i32_0 : i32, i32, i32, i32
  }
}

module attributes {stable_mosaic.version = 11 : i64} {
  func.func @_bn_tanh_kernel(%arg0: i32, %arg1: i32, %arg2: memref<1x6x256xf32, #tpu.memory_space<vmem>>, %arg3: memref<6x1xf32, #tpu.memory_space<vmem>>, %arg4: memref<6x1xf32, #tpu.memory_space<vmem>>, %arg5: memref<1x6x256xf32, #tpu.memory_space<vmem>>) attributes {dimension_semantics = [#tpu.dimension_semantics<parallel>, #tpu.dimension_semantics<parallel>], iteration_bounds = array<i64: 2, 1>, scalar_prefetch = 0 : i64, scratch_operands = 0 : i64, tpu.core_type = #tpu.core_type<tc>, window_params = [{transform_indices = @transform_0, window_bounds = array<i64: 1, 6, 256>}, {pipeline_mode = #tpu.pipeline_mode<synchronous>, transform_indices = @transform_1, window_bounds = array<i64: 6, 1>}, {pipeline_mode = #tpu.pipeline_mode<synchronous>, transform_indices = @transform_2, window_bounds = array<i64: 6, 1>}, {transform_indices = @transform_3, window_bounds = array<i64: 1, 6, 256>}]} {
    %c0 = arith.constant 0 : index
    %c0_0 = arith.constant 0 : index
    %c0_1 = arith.constant 0 : index
    %0 = vector.load %arg2[%c0, %c0_0, %c0_1] : memref<1x6x256xf32, #tpu.memory_space<vmem>>, vector<1x6x256xf32>
    %1 = vector.shape_cast %0 : vector<1x6x256xf32> to vector<6x256xf32>
    %c0_2 = arith.constant 0 : index
    %c0_3 = arith.constant 0 : index
    %2 = vector.load %arg3[%c0_2, %c0_3] : memref<6x1xf32, #tpu.memory_space<vmem>>, vector<6x1xf32>
    %3 = vector.broadcast %2 : vector<6x1xf32> to vector<6x256xf32>
    %4 = arith.mulf %1, %3 : vector<6x256xf32>
    %c0_4 = arith.constant 0 : index
    %c0_5 = arith.constant 0 : index
    %5 = vector.load %arg4[%c0_4, %c0_5] : memref<6x1xf32, #tpu.memory_space<vmem>>, vector<6x1xf32>
    %6 = vector.broadcast %5 : vector<6x1xf32> to vector<6x256xf32>
    %7 = arith.addf %4, %6 : vector<6x256xf32>
    %8 = math.tanh %7 : vector<6x256xf32>
    %c0_6 = arith.constant 0 : index
    %c0_7 = arith.constant 0 : index
    %c0_8 = arith.constant 0 : index
    %9 = vector.load %arg5[%c0_6, %c0_7, %c0_8] : memref<1x6x256xf32, #tpu.memory_space<vmem>>, vector<1x6x256xf32>
    %10 = vector.shape_cast %9 : vector<1x6x256xf32> to vector<6x256xf32>
    %11 = vector.shape_cast %8 : vector<6x256xf32> to vector<1x6x256xf32>
    tpu.vector_store %arg5[%c0_6, %c0_7, %c0_8], %11 {strides = array<i32>} : memref<1x6x256xf32, #tpu.memory_space<vmem>>, vector<1x6x256xf32>,
    return
  }
  func.func @transform_0(%arg0: i32, %arg1: i32) -> (i32, i32, i32) {
    %c0_i32 = arith.constant 0 : i32
    %c0_i32_0 = arith.constant 0 : i32
    return %arg0, %c0_i32, %arg1 : i32, i32, i32
  }
  func.func @transform_1(%arg0: i32, %arg1: i32) -> (i32, i32) {
    %c0_i32 = arith.constant 0 : i32
    %c0_i32_0 = arith.constant 0 : i32
    %c0_i32_1 = arith.constant 0 : i32
    return %c0_i32, %c0_i32_0 : i32, i32
  }
  func.func @transform_2(%arg0: i32, %arg1: i32) -> (i32, i32) {
    %c0_i32 = arith.constant 0 : i32
    %c0_i32_0 = arith.constant 0 : i32
    %c0_i32_1 = arith.constant 0 : i32
    return %c0_i32, %c0_i32_0 : i32, i32
  }
  func.func @transform_3(%arg0: i32, %arg1: i32) -> (i32, i32, i32) {
    %c0_i32 = arith.constant 0 : i32
    %c0_i32_0 = arith.constant 0 : i32
    return %arg0, %c0_i32, %arg1 : i32, i32, i32
  }
}

</mosaic_0001>

<llo_original>
// kernel: encoder_decoder_attention.2
$region0: #{encoder_decoder_attention.2}
  #allocation0 [shape = 'u32[]', space=smem, size = 0x4, offset = 0x4, fixed_abs, tag = 'smem constant byte address 0x4 - core index']
  #allocation1 [shape = 'u32[72,128]{1,0:T(1,128)}', space=vmem, size = 0x9000, scoped, tag = 'internal scratch']
  %s0 = inlined_call_operand.vmem [shape: f32[2,4,256], index: 0, kind: input, shape index: {}]
  %s1 = inlined_call_operand.vmem [shape: f32[2,8,256], index: 1, kind: input, shape index: {}]
  %s2 = inlined_call_operand.vmem [shape: f32[6,32], index: 2, kind: input, shape index: {}]
  %s3 = inlined_call_operand.vmem [shape: f32[2,6,256], index: 3, kind: output, shape index: {0}]
  %s4 = inlined_call_operand.vmem [shape: f32[2,1,6,2], index: 4, kind: output, shape index: {1}]
  %5 = xla_tuple %s3, %s4
  %s6 = sld [smem:[#allocation0]]
  $region53: #{encoder_decoder_attention.2} parent=0
    _
  %s8 = ssub.s32 1, %s6
  %s9 = scalar_select 0, %s8, %s6
  loop: start=0, step=1, limit=4
  $region2: #{encoder_decoder_attention.2} parent=0 // loop_pre_header
    _
  $region3: #{encoder_decoder_attention.2} parent=0 // loop_header
    %s11 = sphi 0, %s15
    %p12 = scmp.ge.s32.totalorder %s11, 4
    %s18 = sphi 0, %s30
    %s19 = sphi 0, %s26
    %s20 = sphi 0, %s18
    %s21 = sphi 0, %s19
    %s22 = sphi 0, %s20
    %s23 = sphi 0, %s21
    %s35 = sphi 0, %s37
    %s38 = sphi 0, %s35
    %s39 = sphi 0, %s38
    %s55 = sphi 0, %s39
    %s63 = sphi 0, %s65
    %s66 = sphi 0, %s63
    %s67 = sphi 0, %s66
    %s83 = sphi 0, %s67
    %s87 = sphi 0, %s87
    %s89 = sphi 0, %s87
    %s90 = sphi 0, %s89
    %s104 = sphi 0, %s90
    %s112 = sphi 0, %s114
    %s115 = sphi 0, %s112
    %s116 = sphi 0, %s115
    %s132 = sphi 0, %s116
    %s140 = sphi 0, %s142
    %s143 = sphi 0, %s140
    %s144 = sphi 0, %s143
    %s160 = sphi 0, %s144
  $region4: #{encoder_decoder_attention.2} parent=0 // loop_header_branch
    %14 = sbr.rel (%p12) target = $region8
  $region5: #{encoder_decoder_attention.2} parent=0 // loop_body
    %s16 = ssub.s32 %s11, 1
    %s17 = ssub.s32 %s11, 2
    %s24 = sadd.s32 1, %s19
    %p25 = scmp.ge.s32.totalorder %s24, 1
    %s26 = scalar_select %p25, 0, %s24
    %s27 = sadd.s32 1, %s18
    %s28 = scalar_select %p25, %s27, %s18
    %p29 = scmp.ge.s32.totalorder %s28, 2
    %s30 = scalar_select %p29, 0, %s28
    %s31 = ssub.s32 %s18, %s30
    %s32 = ssub.s32 %s19, %s26
    %s33 = sor.u32 %s31, %s32
    %p34 = scmp.eq.s32.totalorder %s33, 0
    %s36 = sadd.s32 %s35, 1
    %s37 = scalar_select %p34, %s35, %s36
    %p40 = pneg %p34
    %p41 = scmp.eq.s32.totalorder %s11, 1
    %p42 = por %p40, %p41
    %p43 = scmp.ne.s32.totalorder %s35, %s38
    %p44 = scmp.eq.s32.totalorder %s11, 0
    %p45 = por %p43, %p44
    %p46 = scmp.ne.s32.totalorder %s35, %s38
    %p47 = scmp.eq.s32.totalorder %s16, 1
    %p48 = por %p46, %p47
    %p49 = scmp.ne.s32.totalorder %s38, %s39
    %p50 = scmp.eq.s32.totalorder %s16, 0
    %p51 = por %p49, %p50
    %p52 = scmp.ne.s32.totalorder %s38, %s39
    %p53 = scmp.eq.s32.totalorder %s17, 1
    %p54 = por %p52, %p53
    %p56 = scmp.ne.s32.totalorder %s39, %s55
    %p57 = scmp.eq.s32.totalorder %s17, 0
    %p58 = por %p56, %p57
    %s59 = ssub.s32 %s18, %s30
    %s60 = ssub.s32 %s19, %s26
    %s61 = sor.u32 %s59, %s60
    %p62 = scmp.eq.s32.totalorder %s61, 0
    %s64 = sadd.s32 %s63, 1
    %s65 = scalar_select %p62, %s63, %s64
    %p68 = pneg %p62
    %p69 = scmp.eq.s32.totalorder %s11, 1
    %p70 = por %p68, %p69
    %p71 = scmp.ne.s32.totalorder %s63, %s66
    %p72 = scmp.eq.s32.totalorder %s11, 0
    %p73 = por %p71, %p72
    %p74 = scmp.ne.s32.totalorder %s63, %s66
    %p75 = scmp.eq.s32.totalorder %s16, 1
    %p76 = por %p74, %p75
    %p77 = scmp.ne.s32.totalorder %s66, %s67
    %p78 = scmp.eq.s32.totalorder %s16, 0
    %p79 = por %p77, %p78
    %p80 = scmp.ne.s32.totalorder %s66, %s67
    %p81 = scmp.eq.s32.totalorder %s17, 1
    %p82 = por %p80, %p81
    %p84 = scmp.ne.s32.totalorder %s67, %s83
    %p85 = scmp.eq.s32.totalorder %s17, 0
    %p86 = por %p84, %p85
    %s88 = sadd.s32 %s87, 1
    %p91 = scmp.eq.s32.totalorder %s11, 1
    %p92 = scmp.ne.s32.totalorder %s87, %s89
    %p93 = scmp.eq.s32.totalorder %s11, 0
    %p94 = por %p92, %p93
    %p95 = scmp.ne.s32.totalorder %s87, %s89
    %p96 = scmp.eq.s32.totalorder %s16, 1
    %p97 = por %p95, %p96
    %p98 = scmp.ne.s32.totalorder %s89, %s90
    %p99 = scmp.eq.s32.totalorder %s16, 0
    %p100 = por %p98, %p99
    %p101 = scmp.ne.s32.totalorder %s89, %s90
    %p102 = scmp.eq.s32.totalorder %s17, 1
    %p103 = por %p101, %p102
    %p105 = scmp.ne.s32.totalorder %s90, %s104
    %p106 = scmp.eq.s32.totalorder %s17, 0
    %p107 = por %p105, %p106
    %s108 = ssub.s32 %s18, %s30
    %s109 = ssub.s32 %s19, %s26
    %s110 = sor.u32 %s108, %s109
    %p111 = scmp.eq.s32.totalorder %s110, 0
    %s113 = sadd.s32 %s112, 1
    %s114 = scalar_select %p111, %s112, %s113
    %p117 = pneg %p111
    %p118 = scmp.eq.s32.totalorder %s11, 1
    %p119 = por %p117, %p118
    %p120 = scmp.ne.s32.totalorder %s112, %s115
    %p121 = scmp.eq.s32.totalorder %s11, 0
    %p122 = por %p120, %p121
    %p123 = scmp.ne.s32.totalorder %s112, %s115
    %p124 = scmp.eq.s32.totalorder %s16, 1
    %p125 = por %p123, %p124
    %p126 = scmp.ne.s32.totalorder %s115, %s116
    %p127 = scmp.eq.s32.totalorder %s16, 0
    %p128 = por %p126, %p127
    %p129 = scmp.ne.s32.totalorder %s115, %s116
    %p130 = scmp.eq.s32.totalorder %s17, 1
    %p131 = por %p129, %p130
    %p133 = scmp.ne.s32.totalorder %s116, %s132
    %p134 = scmp.eq.s32.totalorder %s17, 0
    %p135 = por %p133, %p134
    %s136 = ssub.s32 %s18, %s30
    %s137 = ssub.s32 %s19, %s26
    %s138 = sor.u32 %s136, %s137
    %p139 = scmp.eq.s32.totalorder %s138, 0
    %s141 = sadd.s32 %s140, 1
    %s142 = scalar_select %p139, %s140, %s141
    %p145 = pneg %p139
    %p146 = scmp.eq.s32.totalorder %s11, 1
    %p147 = por %p145, %p146
    %p148 = scmp.ne.s32.totalorder %s140, %s143
    %p149 = scmp.eq.s32.totalorder %s11, 0
    %p150 = por %p148, %p149
    %p151 = scmp.ne.s32.totalorder %s140, %s143
    %p152 = scmp.eq.s32.totalorder %s16, 1
    %p153 = por %p151, %p152
    %p154 = scmp.ne.s32.totalorder %s143, %s144
    %p155 = scmp.eq.s32.totalorder %s16, 0
    %p156 = por %p154, %p155
    %p157 = scmp.ne.s32.totalorder %s143, %s144
    %p158 = scmp.eq.s32.totalorder %s17, 1
    %p159 = por %p157, %p158
    %p161 = scmp.ne.s32.totalorder %s144, %s160
    %p162 = scmp.eq.s32.totalorder %s17, 0
    %p163 = por %p161, %p162
    %p164 = scmp.le.s32.totalorder 1, %s11
    %p165 = scmp.lt.s32.totalorder %s11, 3
    %p166 = pnand %p164, %p165
    %p167 = pneg %p166
    // Predicated region
    $region9: #{encoder_decoder_attention.2} parent=5 // pred_check
      _
    $region10: #{encoder_decoder_attention.2} parent=5 // pred_check_branch
      %169 = sbr.rel (%p166) target = $region12
    $region11: #{encoder_decoder_attention.2} parent=5 // pred_region
      %s170 = ssub.s32 %s11, 1
      // Predicated region
      $region13: #{encoder_decoder_attention.2} parent=11 // pred_check
        %p171 = pneg %p100
      $region14: #{encoder_decoder_attention.2} parent=11 // pred_check_branch
        %173 = sbr.rel (%p171) target = $region16
      $region15: #{encoder_decoder_attention.2} parent=11 // pred_region
        _
      $region16: #{encoder_decoder_attention.2} parent=11 // pred_fallthru
        _
    $region12: #{encoder_decoder_attention.2} parent=5 // pred_fallthru
      _
    %p174 = scmp.lt.s32.totalorder %s11, 2
    // Predicated region
    $region17: #{encoder_decoder_attention.2} parent=5 // pred_check
      %p175 = pneg %p174
    $region18: #{encoder_decoder_attention.2} parent=5 // pred_check_branch
      %177 = sbr.rel (%p175) target = $region20
    $region19: #{encoder_decoder_attention.2} parent=5 // pred_region
      // Predicated region
      $region21: #{encoder_decoder_attention.2} parent=19 // pred_check
        %p178 = pneg %p45
      $region22: #{encoder_decoder_attention.2} parent=19 // pred_check_branch
        %180 = sbr.rel (%p178) target = $region24
      $region23: #{encoder_decoder_attention.2} parent=19 // pred_region
        %s181 = smul.u32 2, %s19
        %p182 = scmp.lt.s32.totalorder %s18, 1
        %s183 = scalar_select %p182, %s18, 1
        %p184 = scmp.lt.s32.totalorder %s181, 1
        %s185 = scalar_select %p184, %s181, 1
        %s186 = smul.addr %s183, 2
        %s187 = sadd.s32 %s185, %s186
        %s188 = smul.addr %s187, 4
        %s189 = scalar_lea.vmem %s0, %s188
        %s190 = smul.u32 2, %s19
      $region24: #{encoder_decoder_attention.2} parent=19 // pred_fallthru
        _
      // Predicated region
      $region25: #{encoder_decoder_attention.2} parent=19 // pred_check
        %p191 = pneg %p73
      $region26: #{encoder_decoder_attention.2} parent=19 // pred_check_branch
        %193 = sbr.rel (%p191) target = $region28
      $region27: #{encoder_decoder_attention.2} parent=19 // pred_region
        %s194 = smul.u32 2, %s19
        %p195 = scmp.lt.s32.totalorder %s18, 1
        %s196 = scalar_select %p195, %s18, 1
        %p197 = scmp.lt.s32.totalorder %s194, 1
        %s198 = scalar_select %p197, %s194, 1
        %s199 = smul.addr %s196, 2
        %s200 = sadd.s32 %s198, %s199
        %s201 = smul.addr %s200, 8
        %s202 = scalar_lea.vmem %s1, %s201
        %s203 = smul.u32 2, %s19
      $region28: #{encoder_decoder_attention.2} parent=19 // pred_fallthru
        _
    $region20: #{encoder_decoder_attention.2} parent=5 // pred_fallthru
      _
    %p204 = scmp.le.s32.totalorder 1, %s11
    %p205 = scmp.lt.s32.totalorder %s11, 3
    %p206 = pnand %p204, %p205
    %p207 = pneg %p206
    // Predicated region
    $region29: #{encoder_decoder_attention.2} parent=5 // pred_check
      _
    $region30: #{encoder_decoder_attention.2} parent=5 // pred_check_branch
      %209 = sbr.rel (%p206) target = $region32
    $region31: #{encoder_decoder_attention.2} parent=5 // pred_region
      %s210 = ssub.s32 %s11, 1
      %s211 = smul.u32 2, %s21
      %p212 = scmp.lt.s32.totalorder %s20, 1
      %s213 = scalar_select %p212, %s20, 1
      %p214 = scmp.lt.s32.totalorder %s211, 1
      %s215 = scalar_select %p214, %s211, 1
      %s216 = smul.addr %s213, 2
      %s217 = sadd.s32 %s215, %s216
      %s218 = smul.addr %s217, 4
      %s219 = scalar_lea.vmem %s0, %s218
      %p220 = pneg %p51
      %p221 = pneg %p48
      %s222 = smul.u32 2, %s21
      %p223 = scmp.lt.s32.totalorder %s20, 1
      %s224 = scalar_select %p223, %s20, 1
      %p225 = scmp.lt.s32.totalorder %s222, 1
      %s226 = scalar_select %p225, %s222, 1
      %s227 = smul.addr %s224, 2
      %s228 = sadd.s32 %s226, %s227
      %s229 = smul.addr %s228, 8
      %s230 = scalar_lea.vmem %s1, %s229
      %p231 = pneg %p79
      %p232 = pneg %p76
      %p233 = pneg %p100
      %p234 = pneg %p97
      %p235 = pneg %p128
      %p236 = pneg %p125
      %s237 = smul.u32 2, %s21
      %p238 = scmp.lt.s32.totalorder %s20, 1
      %s239 = scalar_select %p238, %s20, 1
      %p240 = scmp.lt.s32.totalorder %s237, 1
      %s241 = scalar_select %p240, %s237, 1
      %s242 = smul.addr %s239, 2
      %s243 = sadd.s32 %s241, %s242
      %s244 = smul.addr %s243, 8
      %s245 = scalar_lea.vmem %s3, %s244
      %p246 = pneg %p156
      %p247 = pneg %p153
      %p248 = scmp.lt.s32.totalorder %s20, 1
      %s249 = scalar_select %p248, %s20, 1
      %p250 = scmp.lt.s32.totalorder %s21, 0
      %s251 = scalar_select %p250, %s21, 0
      %s252 = sadd.s32 %s251, %s249
      %s253 = smul.addr %s252, 8
      %s254 = scalar_lea.vmem %s4, %s253
      %s255 = smul.u32 2, %s21
      %p256 = scmp.lt.s32.totalorder %s20, 1
      %s257 = scalar_select %p256, %s20, 1
      %p258 = scmp.lt.s32.totalorder %s255, 1
      %s259 = scalar_select %p258, %s255, 1
      %s260 = smul.addr %s257, 2
      %s261 = sadd.s32 %s259, %s260
      %s262 = smul.addr %s261, 4
      %s263 = scalar_lea.vmem %s0, %s262
      %s264 = smul.u32 2, %s21
      %s265 = smul.u32 2, %s21
      %p266 = scmp.lt.s32.totalorder %s20, 1
      %s267 = scalar_select %p266, %s20, 1
      %p268 = scmp.lt.s32.totalorder %s265, 1
      %s269 = scalar_select %p268, %s265, 1
      %s270 = smul.addr %s267, 2
      %s271 = sadd.s32 %s269, %s270
      %s272 = smul.addr %s271, 8
      %s273 = scalar_lea.vmem %s1, %s272
      %s274 = smul.u32 2, %s21
      %s275 = smul.u32 2, %s21
      %p276 = scmp.lt.s32.totalorder %s20, 1
      %s277 = scalar_select %p276, %s20, 1
      %p278 = scmp.lt.s32.totalorder %s275, 1
      %s279 = scalar_select %p278, %s275, 1
      %s280 = smul.addr %s277, 2
      %s281 = sadd.s32 %s279, %s280
      %s282 = smul.addr %s281, 8
      %s283 = scalar_lea.vmem %s3, %s282
      %s284 = smul.u32 2, %s21
      %p285 = scmp.lt.s32.totalorder %s20, 1
      %s286 = scalar_select %p285, %s20, 1
      %p287 = scmp.lt.s32.totalorder %s21, 0
      %s288 = scalar_select %p287, %s21, 0
      %s289 = sadd.s32 %s288, %s286
      %s290 = smul.addr %s289, 8
      %s291 = scalar_lea.vmem %s4, %s290
      %v292 = vld [vmem:[%s263] sm:$0xff]
      %v293 = vld [vmem:[%s273] sm:$0xff]
      %v294 = vld [vmem:[%s273 + $0x8] sm:$0xff]
      %v296 = vrot.slane %v292, 3
      %vm297 = vcmask 1040384
      %v298 = vsel %vm297, %v292, %v296
      %vm299 = vcmask 1041409
      %v300 = vsel %vm299, %v292, %v296
      %v301 = vrot.slane %v300, 1
      %vm302 = vcmask 1042434
      %v303 = vsel %vm302, %v292, %v296
      %v304 = vrot.slane %v303, 2
      %vm305 = vcmask 1043459
      %v306 = vsel %vm305, %v292, %v296
      %v307 = vrot.slane %v306, 3
      %v308 = vperm.slane %v298, 0
      %v309 = vperm.slane %v298, 1
      %v310 = vperm.slane %v301, 0
      %v311 = vperm.slane %v301, 1
      %v312 = vperm.slane %v304, 0
      %v313 = vperm.slane %v304, 1
      %v314 = vperm.slane %v307, 0
      %v315 = vperm.slane %v307, 1
      %v324 = vmul.f32 %v308, %v293
      %v325 = vmul.f32 %v309, %v294
      %v326 = vmul.f32 %v310, %v293
      %v327 = vmul.f32 %v311, %v294
      %v328 = vmul.f32 %v312, %v293
      %v329 = vmul.f32 %v313, %v294
      %v330 = vmul.f32 %v314, %v293
      %v331 = vmul.f32 %v315, %v294
      %v332 = vld [vmem:[%s2] sm:$0x3f]
      %vm333 = vcmask 261120
      %v335 = vsel %vm333, %v332, 0
      %337 = vmatpush.msra.mxu0 0.0
      %338 = vmatpush.msra.mxu0 0.0
      %339 = vmatpush.msra.mxu0 0.0
      %340 = vmatpush.msra.mxu0 0.0
      %341 = vmatpush.msra.mxu0 0.0
      %342 = vmatpush.msra.mxu0 0.0
      %343 = vmatpush.msra.mxu0 0.0
      %344 = vmatpush.msra.mxu0 0.0
      %345 = vmatpush.msra.mxu0 0.0
      %346 = vmatpush.msra.mxu0 0.0
      %347 = vmatpush.msra.mxu0 0.0
      %348 = vmatpush.msra.mxu0 0.0
      %349 = vmatpush.msra.mxu0 %v330
      %350 = vmatpush.msra.mxu0 %v328
      %351 = vmatpush.msra.mxu0 %v326
      %352 = vmatpush.msra.mxu0 %v324
      %353 = vmatmul.f32.gmra.mxu0 %v335
      %v354 = vpop.f32.mrf.mxu0
      %v355 = vadd.f32 0.0, %v354
      %356 = vdwg.mxu0
      %357 = vmatpush.msra.mxu0 0.0
      %358 = vmatpush.msra.mxu0 0.0
      %359 = vmatpush.msra.mxu0 0.0
      %360 = vmatpush.msra.mxu0 0.0
      %361 = vmatpush.msra.mxu0 0.0
      %362 = vmatpush.msra.mxu0 0.0
      %363 = vmatpush.msra.mxu0 0.0
      %364 = vmatpush.msra.mxu0 0.0
      %365 = vmatpush.msra.mxu0 0.0
      %366 = vmatpush.msra.mxu0 0.0
      %367 = vmatpush.msra.mxu0 0.0
      %368 = vmatpush.msra.mxu0 0.0
      %369 = vmatpush.msra.mxu0 %v331
      %370 = vmatpush.msra.mxu0 %v329
      %371 = vmatpush.msra.mxu0 %v327
      %372 = vmatpush.msra.mxu0 %v325
      %373 = vmatmul.f32.gmra.mxu0 %v335
      %v374 = vpop.f32.mrf.mxu0
      %v375 = vadd.f32 0.0, %v374
      %376 = vdwg.mxu0
      %377 = vst [vmem:[%s283] sm:$0x3f] %v355
      %378 = vst [vmem:[%s283 + $0x8] sm:$0x3f] %v375
      %vm379 = vcmask 1045504
      %v380 = vsel %vm379, %v355, 0.0
      %v381 = vsel %vm379, %v375, 0.0
      %v382 = vadd.f32 %v380, %v381
      %383 = vadd.xlane.f32.xlu0 %v382
      %v384 = vpop.xlane.xlu0 %383
      %v385 = vmul.f32 %v355, %v355
      %v386 = vmul.f32 %v375, %v375
      %v387 = vsel %vm379, %v385, 0.0
      %v388 = vsel %vm379, %v386, 0.0
      %v389 = vadd.f32 %v387, %v388
      %390 = vadd.xlane.f32.xlu0 %v389
      %v391 = vpop.xlane.xlu0 %390
      %vm392 = vcmask 7168
      %v393 = vsel %vm392, %v384, %v391
      %vm394 = vcmask 13312
      %395 = vst.msk [vmem:[%s291] sm:$0x3f] %vm394, %v393
      %s396 = smul.u32 2, %s21
      %p397 = scmp.lt.s32.totalorder %s20, 1
      %s398 = scalar_select %p397, %s20, 1
      %p399 = scmp.lt.s32.totalorder %s396, 1
      %s400 = scalar_select %p399, %s396, 1
      %s401 = smul.addr %s398, 2
      %s402 = sadd.s32 %s400, %s401
      %s403 = smul.addr %s402, 8
      %s404 = scalar_lea.vmem %s3, %s403
      %p405 = scmp.lt.s32.totalorder %s20, 1
      %s406 = scalar_select %p405, %s20, 1
      %p407 = scmp.lt.s32.totalorder %s21, 0
      %s408 = scalar_select %p407, %s21, 0
      %s409 = sadd.s32 %s408, %s406
      %s410 = smul.addr %s409, 8
      %s411 = scalar_lea.vmem %s4, %s410
      // Predicated region
      $region33: #{encoder_decoder_attention.2} parent=31 // pred_check
        %p412 = pneg %p125
      $region34: #{encoder_decoder_attention.2} parent=31 // pred_check_branch
        %414 = sbr.rel (%p412) target = $region36
      $region35: #{encoder_decoder_attention.2} parent=31 // pred_region
        %s415 = smul.u32 2, %s21
      $region36: #{encoder_decoder_attention.2} parent=31 // pred_fallthru
        _
      // Predicated region
      $region37: #{encoder_decoder_attention.2} parent=31 // pred_check
        %p416 = pneg %p153
      $region38: #{encoder_decoder_attention.2} parent=31 // pred_check_branch
        %418 = sbr.rel (%p416) target = $region40
      $region39: #{encoder_decoder_attention.2} parent=31 // pred_region
        _
      $region40: #{encoder_decoder_attention.2} parent=31 // pred_fallthru
        _
    $region32: #{encoder_decoder_attention.2} parent=5 // pred_fallthru
      _
    %p419 = scmp.le.s32.totalorder 2, %s11
    // Predicated region
    $region41: #{encoder_decoder_attention.2} parent=5 // pred_check
      %p420 = pneg %p419
    $region42: #{encoder_decoder_attention.2} parent=5 // pred_check_branch
      %422 = sbr.rel (%p420) target = $region44
    $region43: #{encoder_decoder_attention.2} parent=5 // pred_region
      %s423 = ssub.s32 %s11, 2
      // Predicated region
      $region45: #{encoder_decoder_attention.2} parent=43 // pred_check
        %p424 = pneg %p131
      $region46: #{encoder_decoder_attention.2} parent=43 // pred_check_branch
        %426 = sbr.rel (%p424) target = $region48
      $region47: #{encoder_decoder_attention.2} parent=43 // pred_region
        %s427 = smul.u32 2, %s23
        %p428 = scmp.lt.s32.totalorder %s22, 1
        %s429 = scalar_select %p428, %s22, 1
        %p430 = scmp.lt.s32.totalorder %s427, 1
        %s431 = scalar_select %p430, %s427, 1
        %s432 = smul.addr %s429, 2
        %s433 = sadd.s32 %s431, %s432
        %s434 = smul.addr %s433, 8
        %s435 = scalar_lea.vmem %s3, %s434
      $region48: #{encoder_decoder_attention.2} parent=43 // pred_fallthru
        _
      // Predicated region
      $region49: #{encoder_decoder_attention.2} parent=43 // pred_check
        %p436 = pneg %p159
      $region50: #{encoder_decoder_attention.2} parent=43 // pred_check_branch
        %438 = sbr.rel (%p436) target = $region52
      $region51: #{encoder_decoder_attention.2} parent=43 // pred_region
        %p439 = scmp.lt.s32.totalorder %s22, 1
        %s440 = scalar_select %p439, %s22, 1
        %p441 = scmp.lt.s32.totalorder %s23, 0
        %s442 = scalar_select %p441, %s23, 0
        %s443 = sadd.s32 %s442, %s440
        %s444 = smul.addr %s443, 8
        %s445 = scalar_lea.vmem %s4, %s444
      $region52: #{encoder_decoder_attention.2} parent=43 // pred_fallthru
        _
    $region44: #{encoder_decoder_attention.2} parent=5 // pred_fallthru
      _
  $region6: #{encoder_decoder_attention.2} parent=0 // loop_footer
    %s15 = sadd.s32 1, %s11
  $region7: #{encoder_decoder_attention.2} parent=0 // loop_footer_branch
    %10 = sbr.rel target = $region3
  $region8: #{encoder_decoder_attention.2} parent=0 // loop_exit
    _

// kernel: encoder_decoder_attention.3
$region0: #{encoder_decoder_attention.3}
  #allocation0 [shape = 'u32[]', space=smem, size = 0x4, offset = 0x4, fixed_abs, tag = 'smem constant byte address 0x4 - core index']
  #allocation1 [shape = 'u32[72,128]{1,0:T(1,128)}', space=vmem, size = 0x9000, scoped, tag = 'internal scratch']
  %s0 = inlined_call_operand.vmem [shape: f32[2,6,256], index: 0, kind: input, shape index: {}, may-alias: {0,3}]
  %s1 = inlined_call_operand.vmem [shape: f32[6,1], index: 1, kind: input, shape index: {}]
  %s2 = inlined_call_operand.vmem [shape: f32[6,1], index: 2, kind: input, shape index: {}]
  %s3 = inlined_call_operand.vmem [shape: f32[2,6,256], index: 3, kind: output, shape index: {}, may-alias: {0,3}]
  %s4 = sld [smem:[#allocation0]]
  $region45: #{encoder_decoder_attention.3} parent=0
    _
  %s6 = ssub.s32 1, %s4
  %s7 = scalar_select 0, %s6, %s4
  loop: start=0, step=1, limit=4
  $region2: #{encoder_decoder_attention.3} parent=0 // loop_pre_header
    _
  $region3: #{encoder_decoder_attention.3} parent=0 // loop_header
    %s9 = sphi 0, %s13
    %p10 = scmp.ge.s32.totalorder %s9, 4
    %s16 = sphi 0, %s28
    %s17 = sphi 0, %s24
    %s18 = sphi 0, %s16
    %s19 = sphi 0, %s17
    %s20 = sphi 0, %s18
    %s21 = sphi 0, %s19
    %s33 = sphi 0, %s35
    %s36 = sphi 0, %s33
    %s37 = sphi 0, %s36
    %s53 = sphi 0, %s37
    %s57 = sphi 0, %s57
    %s59 = sphi 0, %s57
    %s60 = sphi 0, %s59
    %s74 = sphi 0, %s60
    %s78 = sphi 0, %s78
    %s80 = sphi 0, %s78
    %s81 = sphi 0, %s80
    %s95 = sphi 0, %s81
    %s103 = sphi 0, %s105
    %s106 = sphi 0, %s103
    %s107 = sphi 0, %s106
    %s123 = sphi 0, %s107
  $region4: #{encoder_decoder_attention.3} parent=0 // loop_header_branch
    %12 = sbr.rel (%p10) target = $region8
  $region5: #{encoder_decoder_attention.3} parent=0 // loop_body
    %s14 = ssub.s32 %s9, 1
    %s15 = ssub.s32 %s9, 2
    %s22 = sadd.s32 1, %s17
    %p23 = scmp.ge.s32.totalorder %s22, 1
    %s24 = scalar_select %p23, 0, %s22
    %s25 = sadd.s32 1, %s16
    %s26 = scalar_select %p23, %s25, %s16
    %p27 = scmp.ge.s32.totalorder %s26, 2
    %s28 = scalar_select %p27, 0, %s26
    %s29 = ssub.s32 %s16, %s28
    %s30 = ssub.s32 %s17, %s24
    %s31 = sor.u32 %s29, %s30
    %p32 = scmp.eq.s32.totalorder %s31, 0
    %s34 = sadd.s32 %s33, 1
    %s35 = scalar_select %p32, %s33, %s34
    %p38 = pneg %p32
    %p39 = scmp.eq.s32.totalorder %s9, 1
    %p40 = por %p38, %p39
    %p41 = scmp.ne.s32.totalorder %s33, %s36
    %p42 = scmp.eq.s32.totalorder %s9, 0
    %p43 = por %p41, %p42
    %p44 = scmp.ne.s32.totalorder %s33, %s36
    %p45 = scmp.eq.s32.totalorder %s14, 1
    %p46 = por %p44, %p45
    %p47 = scmp.ne.s32.totalorder %s36, %s37
    %p48 = scmp.eq.s32.totalorder %s14, 0
    %p49 = por %p47, %p48
    %p50 = scmp.ne.s32.totalorder %s36, %s37
    %p51 = scmp.eq.s32.totalorder %s15, 1
    %p52 = por %p50, %p51
    %p54 = scmp.ne.s32.totalorder %s37, %s53
    %p55 = scmp.eq.s32.totalorder %s15, 0
    %p56 = por %p54, %p55
    %s58 = sadd.s32 %s57, 1
    %p61 = scmp.eq.s32.totalorder %s9, 1
    %p62 = scmp.ne.s32.totalorder %s57, %s59
    %p63 = scmp.eq.s32.totalorder %s9, 0
    %p64 = por %p62, %p63
    %p65 = scmp.ne.s32.totalorder %s57, %s59
    %p66 = scmp.eq.s32.totalorder %s14, 1
    %p67 = por %p65, %p66
    %p68 = scmp.ne.s32.totalorder %s59, %s60
    %p69 = scmp.eq.s32.totalorder %s14, 0
    %p70 = por %p68, %p69
    %p71 = scmp.ne.s32.totalorder %s59, %s60
    %p72 = scmp.eq.s32.totalorder %s15, 1
    %p73 = por %p71, %p72
    %p75 = scmp.ne.s32.totalorder %s60, %s74
    %p76 = scmp.eq.s32.totalorder %s15, 0
    %p77 = por %p75, %p76
    %s79 = sadd.s32 %s78, 1
    %p82 = scmp.eq.s32.totalorder %s9, 1
    %p83 = scmp.ne.s32.totalorder %s78, %s80
    %p84 = scmp.eq.s32.totalorder %s9, 0
    %p85 = por %p83, %p84
    %p86 = scmp.ne.s32.totalorder %s78, %s80
    %p87 = scmp.eq.s32.totalorder %s14, 1
    %p88 = por %p86, %p87
    %p89 = scmp.ne.s32.totalorder %s80, %s81
    %p90 = scmp.eq.s32.totalorder %s14, 0
    %p91 = por %p89, %p90
    %p92 = scmp.ne.s32.totalorder %s80, %s81
    %p93 = scmp.eq.s32.totalorder %s15, 1
    %p94 = por %p92, %p93
    %p96 = scmp.ne.s32.totalorder %s81, %s95
    %p97 = scmp.eq.s32.totalorder %s15, 0
    %p98 = por %p96, %p97
    %s99 = ssub.s32 %s16, %s28
    %s100 = ssub.s32 %s17, %s24
    %s101 = sor.u32 %s99, %s100
    %p102 = scmp.eq.s32.totalorder %s101, 0
    %s104 = sadd.s32 %s103, 1
    %s105 = scalar_select %p102, %s103, %s104
    %p108 = pneg %p102
    %p109 = scmp.eq.s32.totalorder %s9, 1
    %p110 = por %p108, %p109
    %p111 = scmp.ne.s32.totalorder %s103, %s106
    %p112 = scmp.eq.s32.totalorder %s9, 0
    %p113 = por %p111, %p112
    %p114 = scmp.ne.s32.totalorder %s103, %s106
    %p115 = scmp.eq.s32.totalorder %s14, 1
    %p116 = por %p114, %p115
    %p117 = scmp.ne.s32.totalorder %s106, %s107
    %p118 = scmp.eq.s32.totalorder %s14, 0
    %p119 = por %p117, %p118
    %p120 = scmp.ne.s32.totalorder %s106, %s107
    %p121 = scmp.eq.s32.totalorder %s15, 1
    %p122 = por %p120, %p121
    %p124 = scmp.ne.s32.totalorder %s107, %s123
    %p125 = scmp.eq.s32.totalorder %s15, 0
    %p126 = por %p124, %p125
    %p127 = scmp.le.s32.totalorder 1, %s9
    %p128 = scmp.lt.s32.totalorder %s9, 3
    %p129 = pnand %p127, %p128
    %p130 = pneg %p129
    // Predicated region
    $region9: #{encoder_decoder_attention.3} parent=5 // pred_check
      _
    $region10: #{encoder_decoder_attention.3} parent=5 // pred_check_branch
      %132 = sbr.rel (%p129) target = $region12
    $region11: #{encoder_decoder_attention.3} parent=5 // pred_region
      %s133 = ssub.s32 %s9, 1
      // Predicated region
      $region13: #{encoder_decoder_attention.3} parent=11 // pred_check
        %p134 = pneg %p70
      $region14: #{encoder_decoder_attention.3} parent=11 // pred_check_branch
        %136 = sbr.rel (%p134) target = $region16
      $region15: #{encoder_decoder_attention.3} parent=11 // pred_region
        _
      $region16: #{encoder_decoder_attention.3} parent=11 // pred_fallthru
        _
      // Predicated region
      $region17: #{encoder_decoder_attention.3} parent=11 // pred_check
        %p137 = pneg %p91
      $region18: #{encoder_decoder_attention.3} parent=11 // pred_check_branch
        %139 = sbr.rel (%p137) target = $region20
      $region19: #{encoder_decoder_attention.3} parent=11 // pred_region
        _
      $region20: #{encoder_decoder_attention.3} parent=11 // pred_fallthru
        _
    $region12: #{encoder_decoder_attention.3} parent=5 // pred_fallthru
      _
    %p140 = scmp.lt.s32.totalorder %s9, 2
    // Predicated region
    $region21: #{encoder_decoder_attention.3} parent=5 // pred_check
      %p141 = pneg %p140
    $region22: #{encoder_decoder_attention.3} parent=5 // pred_check_branch
      %143 = sbr.rel (%p141) target = $region24
    $region23: #{encoder_decoder_attention.3} parent=5 // pred_region
      // Predicated region
      $region25: #{encoder_decoder_attention.3} parent=23 // pred_check
        %p144 = pneg %p43
      $region26: #{encoder_decoder_attention.3} parent=23 // pred_check_branch
        %146 = sbr.rel (%p144) target = $region28
      $region27: #{encoder_decoder_attention.3} parent=23 // pred_region
        %s147 = smul.u32 2, %s17
        %p148 = scmp.lt.s32.totalorder %s16, 1
        %s149 = scalar_select %p148, %s16, 1
        %p150 = scmp.lt.s32.totalorder %s147, 1
        %s151 = scalar_select %p150, %s147, 1
        %s152 = smul.addr %s149, 2
        %s153 = sadd.s32 %s151, %s152
        %s154 = smul.addr %s153, 8
        %s155 = scalar_lea.vmem %s0, %s154
        %s156 = smul.u32 2, %s17
      $region28: #{encoder_decoder_attention.3} parent=23 // pred_fallthru
        _
    $region24: #{encoder_decoder_attention.3} parent=5 // pred_fallthru
      _
    %p157 = scmp.le.s32.totalorder 1, %s9
    %p158 = scmp.lt.s32.totalorder %s9, 3
    %p159 = pnand %p157, %p158
    %p160 = pneg %p159
    // Predicated region
    $region29: #{encoder_decoder_attention.3} parent=5 // pred_check
      _
    $region30: #{encoder_decoder_attention.3} parent=5 // pred_check_branch
      %162 = sbr.rel (%p159) target = $region32
    $region31: #{encoder_decoder_attention.3} parent=5 // pred_region
      %s163 = ssub.s32 %s9, 1
      %s164 = smul.u32 2, %s19
      %p165 = scmp.lt.s32.totalorder %s18, 1
      %s166 = scalar_select %p165, %s18, 1
      %p167 = scmp.lt.s32.totalorder %s164, 1
      %s168 = scalar_select %p167, %s164, 1
      %s169 = smul.addr %s166, 2
      %s170 = sadd.s32 %s168, %s169
      %s171 = smul.addr %s170, 8
      %s172 = scalar_lea.vmem %s0, %s171
      %p173 = pneg %p49
      %p174 = pneg %p46
      %p175 = pneg %p70
      %p176 = pneg %p67
      %p177 = pneg %p91
      %p178 = pneg %p88
      %p179 = pneg %p119
      %p180 = pneg %p116
      %s181 = smul.u32 2, %s19
      %p182 = scmp.lt.s32.totalorder %s18, 1
      %s183 = scalar_select %p182, %s18, 1
      %p184 = scmp.lt.s32.totalorder %s181, 1
      %s185 = scalar_select %p184, %s181, 1
      %s186 = smul.addr %s183, 2
      %s187 = sadd.s32 %s185, %s186
      %s188 = smul.addr %s187, 8
      %s189 = scalar_lea.vmem %s3, %s188
      %s190 = smul.u32 2, %s19
      %p191 = scmp.lt.s32.totalorder %s18, 1
      %s192 = scalar_select %p191, %s18, 1
      %p193 = scmp.lt.s32.totalorder %s190, 1
      %s194 = scalar_select %p193, %s190, 1
      %s195 = smul.addr %s192, 2
      %s196 = sadd.s32 %s194, %s195
      %s197 = smul.addr %s196, 8
      %s198 = scalar_lea.vmem %s0, %s197
      %s199 = smul.u32 2, %s19
      %s200 = smul.u32 2, %s19
      %p201 = scmp.lt.s32.totalorder %s18, 1
      %s202 = scalar_select %p201, %s18, 1
      %p203 = scmp.lt.s32.totalorder %s200, 1
      %s204 = scalar_select %p203, %s200, 1
      %s205 = smul.addr %s202, 2
      %s206 = sadd.s32 %s204, %s205
      %s207 = smul.addr %s206, 8
      %s208 = scalar_lea.vmem %s3, %s207
      %s209 = smul.u32 2, %s19
      %v210 = vld [vmem:[%s198] sm:$0x3f]
      %v211 = vld [vmem:[%s198 + $0x8] sm:$0x3f]
      %v212 = vld [vmem:[%s1] sm:$0x3f]
      %214 = vset.pattern.permute.xlu0 0
      %215 = vperm.xlu0 %214, %v212
      %v216 = vpop.permute.xlu0 %215
      %v218 = vmul.f32 %v210, %v216
      %v219 = vmul.f32 %v211, %v216
      %v220 = vld [vmem:[%s2] sm:$0x3f]
      %222 = vset.pattern.permute.xlu0 0
      %223 = vperm.xlu0 %222, %v220
      %v224 = vpop.permute.xlu0 %223
      %v226 = vadd.f32 %v218, %v224
      %v227 = vadd.f32 %v219, %v224
      %v228 = vtanh.pop %v226
      %v229 = vtanh.pop %v227
      %230 = vst [vmem:[%s208] sm:$0x3f] %v228
      %231 = vst [vmem:[%s208 + $0x8] sm:$0x3f] %v229
      %s232 = smul.u32 2, %s19
      %p233 = scmp.lt.s32.totalorder %s18, 1
      %s234 = scalar_select %p233, %s18, 1
      %p235 = scmp.lt.s32.totalorder %s232, 1
      %s236 = scalar_select %p235, %s232, 1
      %s237 = smul.addr %s234, 2
      %s238 = sadd.s32 %s236, %s237
      %s239 = smul.addr %s238, 8
      %s240 = scalar_lea.vmem %s3, %s239
      // Predicated region
      $region33: #{encoder_decoder_attention.3} parent=31 // pred_check
        %p241 = pneg %p116
      $region34: #{encoder_decoder_attention.3} parent=31 // pred_check_branch
        %243 = sbr.rel (%p241) target = $region36
      $region35: #{encoder_decoder_attention.3} parent=31 // pred_region
        %s244 = smul.u32 2, %s19
      $region36: #{encoder_decoder_attention.3} parent=31 // pred_fallthru
        _
    $region32: #{encoder_decoder_attention.3} parent=5 // pred_fallthru
      _
    %p245 = scmp.le.s32.totalorder 2, %s9
    // Predicated region
    $region37: #{encoder_decoder_attention.3} parent=5 // pred_check
      %p246 = pneg %p245
    $region38: #{encoder_decoder_attention.3} parent=5 // pred_check_branch
      %248 = sbr.rel (%p246) target = $region40
    $region39: #{encoder_decoder_attention.3} parent=5 // pred_region
      %s249 = ssub.s32 %s9, 2
      // Predicated region
      $region41: #{encoder_decoder_attention.3} parent=39 // pred_check
        %p250 = pneg %p122
      $region42: #{encoder_decoder_attention.3} parent=39 // pred_check_branch
        %252 = sbr.rel (%p250) target = $region44
      $region43: #{encoder_decoder_attention.3} parent=39 // pred_region
        %s253 = smul.u32 2, %s21
        %p254 = scmp.lt.s32.totalorder %s20, 1
        %s255 = scalar_select %p254, %s20, 1
        %p256 = scmp.lt.s32.totalorder %s253, 1
        %s257 = scalar_select %p256, %s253, 1
        %s258 = smul.addr %s255, 2
        %s259 = sadd.s32 %s257, %s258
        %s260 = smul.addr %s259, 8
        %s261 = scalar_lea.vmem %s3, %s260
      $region44: #{encoder_decoder_attention.3} parent=39 // pred_fallthru
        _
    $region40: #{encoder_decoder_attention.3} parent=5 // pred_fallthru
      _
  $region6: #{encoder_decoder_attention.3} parent=0 // loop_footer
    %s13 = sadd.s32 1, %s9
  $region7: #{encoder_decoder_attention.3} parent=0 // loop_footer_branch
    %8 = sbr.rel target = $region3
  $region8: #{encoder_decoder_attention.3} parent=0 // loop_exit
    _

</llo_original>
